<compile_context>
chip_gen: v7x
topology: tpu7x:2x2x1
jax: 0.10.0
libtpu: 0.0.40
codegen_flags: <defaults>
</compile_context>

<pallas_src>
import functools

import jax
import jax.numpy as jnp
from jax import lax
from jax.experimental import pallas as pl
from jax.experimental.pallas import tpu as pltpu


def _dc_ca_stats_kernel(x_ref, tgt_ref, skel_ref,
                        inter_ref, spred_ref, sgt_ref, ce_ref,
                        *, num_classes, tile_rows, n_valid, need_mask):
    ti = pl.program_id(1)
    C = num_classes
    TR = tile_rows

    labels = tgt_ref[...]                         # (TR, 128) int32 label map
    skel = skel_ref[...].astype(jnp.float32)      # (TR, 128) distance-map weight

    # Flat-index validity mask: covers wrapper lane-padding (N -> multiple of 128) and
    # Pallas OOB garbage rows of a ragged last chunk. Only emitted when needed.
    if need_mask:
        ridx = lax.broadcasted_iota(jnp.int32, (TR, 128), 0)
        lidx = lax.broadcasted_iota(jnp.int32, (TR, 128), 1)
        valid = (ti * (TR * 128) + ridx * 128 + lidx) < n_valid
    else:
        valid = None

    # ---- pass 1: per-pixel max over channels (pure VPU, no (C,TR,128) f32 temp) ----
    m = x_ref[0].astype(jnp.float32)
    for c in range(1, C):
        m = jnp.maximum(m, x_ref[c].astype(jnp.float32))

    # ---- pass 2: softmax denominator (exp streams through the EUP slot) ----
    s = jnp.exp(x_ref[0].astype(jnp.float32) - m)
    for c in range(1, C):
        s = s + jnp.exp(x_ref[c].astype(jnp.float32) - m)

    # Near-exact reciprocal: EUP approx + one Newton refinement (HBM-bound => free).
    inv_s = pl.reciprocal(s, approx=True)
    inv_s = inv_s * (2.0 - s * inv_s)

    # ---- pass 3: per-channel stats; exp recomputed per channel (EUP has slack) ----
    x_at_tgt = jnp.zeros_like(m)                  # logit at the gt class, per pixel
    for c in range(C):
        xc = x_ref[c].astype(jnp.float32)
        pc = jnp.exp(xc - m) * inv_s              # softmax prob of class c
        mc = labels == c
        if valid is not None:
            mc = jnp.logical_and(mc, valid)
            pc = jnp.where(valid, pc, 0.0)        # where (not multiply): garbage may be NaN
        mf = mc.astype(jnp.float32)
        # sublane fold only: (TR,128) -> (128,) lane partials; the cross-lane collapse
        # happens once in the JAX glue, not per grid step.
        inter_ref[c] = jnp.sum(mf * pc, axis=0)
        spred_ref[c] = jnp.sum(pc, axis=0)
        sgt_ref[c] = jnp.sum(mf, axis=0)
        x_at_tgt = x_at_tgt + mf * xc

    # ---- skel-weighted cross entropy lane partials ----
    lse = jnp.log(s) + m                          # per-pixel logsumexp over channels
    w = (lse - x_at_tgt) * skel
    if valid is not None:
        w = jnp.where(valid, w, 0.0)
    ce_ref[...] = jnp.sum(w, axis=0, keepdims=True)   # (1, 128)


def _physical_vmem_bytes():
    try:
        info = pltpu.get_tpu_info()
        v = getattr(info, "vmem_capacity_bytes", None)
        if v:
            return int(v)
    except Exception:
        pass
    return 64 * 1024 * 1024     # conservative (v7x-sized) fallback


def _choose_tile_rows(C, R, x_item, tgt_item, skel_item, workset_budget):
    """Rows (of 128 lanes) per tile: as big as the VMEM working set allows."""
    # per-row working set: double-buffered inputs + ~(C+8) f32 (rows,128) temporaries
    per_row = 128 * (2 * C * x_item + 2 * (tgt_item + skel_item) + (C + 8) * 4)
    tr = int(workset_budget) // per_row
    # cap a single logits buffer around 8 MiB: past that, HBM roofline is already hit
    tr = min(tr, (8 * 1024 * 1024) // max(1, C * 128 * x_item))
    tr = max(16, (tr // 16) * 16)   # multiple of 16 (covers f32 and bf16 sublane tiling)
    return min(tr, R)


def dc_ca_loss(net_output, target, skel, *,
               weight_ce=1.0, weight_dc=1.0, weight_tv=1.0,
               # soft_dice_kwargs (nnU-Net defaults)
               dice_smooth=1e-5, dice_do_bg=False, dice_batch_dice=False,
               # TverskyLoss defaults from the module
               tv_smooth=1.0, tv_alpha=0.1, tv_beta=0.9,
               tv_do_bg=True, tv_batch_dice=False,
               tile_rows=None):
    # TODO(synk): ignore_label handling (masked dice stats) is not implemented (module
    #             default ignore_label=None).
    B, C, X, Y = net_output.shape
    N = X * Y

    logits = jnp.reshape(net_output, (B, C, N))           # keep input dtype; cast in-kernel
    labels = jnp.reshape(target, (B, N)).astype(jnp.int32)
    skel2d = jnp.reshape(skel, (B, N))

    # lane-dense flat layout: pad N up to a multiple of 128 (rare), view as rows of 128
    NP = ((N + 127) // 128) * 128
    if NP != N:
        pad = NP - N
        logits = jnp.pad(logits, ((0, 0), (0, 0), (0, pad)))
        labels = jnp.pad(labels, ((0, 0), (0, pad)))
        skel2d = jnp.pad(skel2d, ((0, 0), (0, pad)))
    R = NP // 128
    logits = jnp.reshape(logits, (B, C, R, 128))
    labels = jnp.reshape(labels, (B, R, 128))
    skel2d = jnp.reshape(skel2d, (B, R, 128))

    phys = _physical_vmem_bytes()
    vmem_limit = max(32 * 1024 * 1024, min(phys - (8 << 20), int(phys * 0.75)))
    if tile_rows is None:
        tr = _choose_tile_rows(C, R, logits.dtype.itemsize, 4, skel2d.dtype.itemsize,
                               int(vmem_limit * 0.8))
    else:
        tr = min(int(tile_rows), R)
    n_chunks = pl.cdiv(R, tr)
    need_mask = (n_chunks * tr * 128) != N

    kernel = functools.partial(_dc_ca_stats_kernel, num_classes=C, tile_rows=tr,
                               n_valid=N, need_mask=need_mask)

    # TODO(synk): for very small tiles a pipeline_mode=pl.Buffered(3) on the logits spec
    #             would hide DMA startup; with the large VMEM-budgeted tiles used here the
    #             default double buffering already covers it.
    inter_p, spred_p, sgt_p, ce_p = pl.pallas_call(
        kernel,
        grid=(B, n_chunks),
        in_specs=[
            pl.BlockSpec((None, C, tr, 128), lambda b, t: (b, 0, t, 0)),    # logits
            pl.BlockSpec((None, tr, 128), lambda b, t: (b, t, 0)),           # labels
            pl.BlockSpec((None, tr, 128), lambda b, t: (b, t, 0)),           # skel
        ],
        out_specs=(
            pl.BlockSpec((None, None, C, 128), lambda b, t: (b, t, 0, 0)),   # intersect
            pl.BlockSpec((None, None, C, 128), lambda b, t: (b, t, 0, 0)),   # sum_pred
            pl.BlockSpec((None, None, C, 128), lambda b, t: (b, t, 0, 0)),   # sum_gt
            pl.BlockSpec((None, None, 1, 128), lambda b, t: (b, t, 0, 0)),   # ce*skel partials
        ),
        out_shape=(
            jax.ShapeDtypeStruct((B, n_chunks, C, 128), jnp.float32),
            jax.ShapeDtypeStruct((B, n_chunks, C, 128), jnp.float32),
            jax.ShapeDtypeStruct((B, n_chunks, C, 128), jnp.float32),
            jax.ShapeDtypeStruct((B, n_chunks, 1, 128), jnp.float32),
        ),
        compiler_params=pltpu.CompilerParams(
            dimension_semantics=("parallel", "parallel"),
            vmem_limit_bytes=int(vmem_limit),
        ),
    )(logits, labels, skel2d)

    # single cross-lane / cross-chunk collapse (tiny arrays)
    inter = jnp.sum(inter_p, axis=(1, 3))      # (B, C)
    spred = jnp.sum(spred_p, axis=(1, 3))
    sgt = jnp.sum(sgt_p, axis=(1, 3))
    ce_sum = jnp.sum(ce_p)

    # ---------- MemoryEfficientSoftDiceLoss (apply_nonlin = softmax over dim 1) ----------
    i_dc, sp_dc, sg_dc = inter, spred, sgt
    if not dice_do_bg:
        i_dc, sp_dc, sg_dc = i_dc[:, 1:], sp_dc[:, 1:], sg_dc[:, 1:]
    if dice_batch_dice:
        i_dc, sp_dc, sg_dc = i_dc.sum(0), sp_dc.sum(0), sg_dc.sum(0)
    dc = (2.0 * i_dc + dice_smooth) / jnp.clip(sg_dc + sp_dc + dice_smooth, 1e-8)
    dc_loss = -jnp.mean(dc)

    # ---------- skel-weighted cross-entropy: mean(CE(net_output, target) * skel) ----------
    ce_loss = ce_sum / jnp.float32(B * X * Y)

    # ---------- TverskyLoss (apply_nonlin = softmax over dim 1, square=False) ----------
    tp = inter
    fp = spred - inter
    fn = sgt - inter
    if tv_batch_dice:
        tp, fp, fn = tp.sum(0), fp.sum(0), fn.sum(0)
    tversky = (tp + tv_smooth) / (tp + tv_alpha * fp + tv_beta * fn + tv_smooth)
    if not tv_do_bg:
        tversky = tversky[1:] if tv_batch_dice else tversky[:, 1:]
    tv_loss = -jnp.mean(tversky)

    return weight_dc * dc_loss + weight_tv * tv_loss + weight_ce * ce_loss


def _reference_dc_ca_loss(net_output, target, skel, *,
                          weight_ce=1.0, weight_dc=1.0, weight_tv=1.0,
                          dice_smooth=1e-5, dice_do_bg=False,
                          tv_smooth=1.0, tv_alpha=0.1, tv_beta=0.9):
    """Pure-JAX reference of the same forward math (default kwargs)."""
    x = net_output.astype(jnp.float32)
    B, C, X, Y = x.shape
    labels = jnp.reshape(target, (B, X, Y)).astype(jnp.int32)
    skel = jnp.reshape(skel, (B, X, Y)).astype(jnp.float32)

    p = jax.nn.softmax(x, axis=1)
    onehot = jax.nn.one_hot(labels, C, axis=1, dtype=jnp.float32)
    inter = jnp.sum(p * onehot, axis=(2, 3))
    spred = jnp.sum(p, axis=(2, 3))
    sgt = jnp.sum(onehot, axis=(2, 3))

    i_dc, sp_dc, sg_dc = (inter, spred, sgt) if dice_do_bg else \
        (inter[:, 1:], spred[:, 1:], sgt[:, 1:])
    dc = (2.0 * i_dc + dice_smooth) / jnp.clip(sg_dc + sp_dc + dice_smooth, 1e-8)
    dc_loss = -jnp.mean(dc)

    ce = -jnp.sum(jax.nn.log_softmax(x, axis=1) * onehot, axis=1)
    ce_loss = jnp.mean(ce * skel)

    tp, fp, fn = inter, spred - inter, sgt - inter
    tversky = (tp + tv_smooth) / (tp + tv_alpha * fp + tv_beta * fn + tv_smooth)
    tv_loss = -jnp.mean(tversky)

    return weight_dc * dc_loss + weight_tv * tv_loss + weight_ce * ce_loss


if __name__ == "__main__":
    key = jax.random.PRNGKey(0)

    # ---- case 1: lane-aligned small shapes ----
    B, C, X, Y = 2, 4, 16, 16
    k1, k2, k3, k4 = jax.random.split(key, 4)
    net_output = jax.random.normal(k1, (B, C, X, Y), dtype=jnp.float32)   # logits
    target = jax.random.randint(k2, (B, 1, X, Y), 0, C, dtype=jnp.int32)  # label map
    skel = jax.random.uniform(k3, (B, X, Y), dtype=jnp.float32)           # distance weights

    loss = jax.block_until_ready(dc_ca_loss(net_output, target, skel))
    assert jnp.isfinite(loss)
    ref = _reference_dc_ca_loss(net_output, target, skel)
    assert jnp.allclose(loss, ref, rtol=1e-3, atol=1e-3), (loss, ref)

    # ---- case 2: odd spatial size (exercises lane padding + flat-index mask path) ----
    B2, C2, X2, Y2 = 1, 3, 5, 25
    j1, j2, j3 = jax.random.split(k4, 3)
    net2 = jax.random.normal(j1, (B2, C2, X2, Y2), dtype=jnp.float32)
    tgt2 = jax.random.randint(j2, (B2, 1, X2, Y2), 0, C2, dtype=jnp.int32)
    skl2 = jax.random.uniform(j3, (B2, X2, Y2), dtype=jnp.float32)

    loss2 = jax.block_until_ready(dc_ca_loss(net2, tgt2, skl2))
    assert jnp.isfinite(loss2)
    ref2 = _reference_dc_ca_loss(net2, tgt2, skl2)
    assert jnp.allclose(loss2, ref2, rtol=1e-3, atol=1e-3), (loss2, ref2)

    print("KERNEL_OK")
</pallas_src>

<mosaic_0001>
module attributes {stable_mosaic.version = 11 : i64} {
  func.func @_dc_ca_stats_kernel(%arg0: i32, %arg1: i32, %arg2: memref<1x4x2x128xf32, #tpu.memory_space<vmem>>, %arg3: memref<1x2x128xi32, #tpu.memory_space<vmem>>, %arg4: memref<1x2x128xf32, #tpu.memory_space<vmem>>, %arg5: memref<1x1x4x128xf32, #tpu.memory_space<vmem>>, %arg6: memref<1x1x4x128xf32, #tpu.memory_space<vmem>>, %arg7: memref<1x1x4x128xf32, #tpu.memory_space<vmem>>, %arg8: memref<1x1x1x128xf32, #tpu.memory_space<vmem>>) attributes {dimension_semantics = [#tpu.dimension_semantics<parallel>, #tpu.dimension_semantics<parallel>], iteration_bounds = array<i64: 2, 1>, scalar_prefetch = 0 : i64, scratch_operands = 0 : i64, tpu.core_type = #tpu.core_type<tc>, window_params = [{transform_indices = @transform_0, window_bounds = array<i64: 1, 4, 2, 128>}, {transform_indices = @transform_1, window_bounds = array<i64: 1, 2, 128>}, {transform_indices = @transform_2, window_bounds = array<i64: 1, 2, 128>}, {transform_indices = @transform_3, window_bounds = array<i64: 1, 1, 4, 128>}, {transform_indices = @transform_4, window_bounds = array<i64: 1, 1, 4, 128>}, {transform_indices = @transform_5, window_bounds = array<i64: 1, 1, 4, 128>}, {transform_indices = @transform_6, window_bounds = array<i64: 1, 1, 1, 128>}]} {
    %c0 = arith.constant 0 : index
    %c0_0 = arith.constant 0 : index
    %c0_1 = arith.constant 0 : index
    %0 = vector.load %arg3[%c0, %c0_0, %c0_1] : memref<1x2x128xi32, #tpu.memory_space<vmem>>, vector<1x2x128xi32>
    %1 = vector.shape_cast %0 : vector<1x2x128xi32> to vector<2x128xi32>
    %c0_2 = arith.constant 0 : index
    %c0_3 = arith.constant 0 : index
    %c0_4 = arith.constant 0 : index
    %2 = vector.load %arg4[%c0_2, %c0_3, %c0_4] : memref<1x2x128xf32, #tpu.memory_space<vmem>>, vector<1x2x128xf32>
    %3 = vector.shape_cast %2 : vector<1x2x128xf32> to vector<2x128xf32>
    %c0_5 = arith.constant 0 : index
    %c0_6 = arith.constant 0 : index
    %c0_7 = arith.constant 0 : index
    %c0_8 = arith.constant 0 : index
    %4 = vector.load %arg2[%c0_5, %c0_6, %c0_7, %c0_8] : memref<1x4x2x128xf32, #tpu.memory_space<vmem>>, vector<1x1x2x128xf32>
    %5 = vector.shape_cast %4 : vector<1x1x2x128xf32> to vector<2x128xf32>
    %c0_9 = arith.constant 0 : index
    %c1 = arith.constant 1 : index
    %c0_10 = arith.constant 0 : index
    %c0_11 = arith.constant 0 : index
    %6 = vector.load %arg2[%c0_9, %c1, %c0_10, %c0_11] : memref<1x4x2x128xf32, #tpu.memory_space<vmem>>, vector<1x1x2x128xf32>
    %7 = vector.shape_cast %6 : vector<1x1x2x128xf32> to vector<2x128xf32>
    %8 = arith.maximumf %5, %7 : vector<2x128xf32>
    %c0_12 = arith.constant 0 : index
    %c2 = arith.constant 2 : index
    %c0_13 = arith.constant 0 : index
    %c0_14 = arith.constant 0 : index
    %9 = vector.load %arg2[%c0_12, %c2, %c0_13, %c0_14] : memref<1x4x2x128xf32, #tpu.memory_space<vmem>>, vector<1x1x2x128xf32>
    %10 = vector.shape_cast %9 : vector<1x1x2x128xf32> to vector<2x128xf32>
    %11 = arith.maximumf %8, %10 : vector<2x128xf32>
    %c0_15 = arith.constant 0 : index
    %c3 = arith.constant 3 : index
    %c0_16 = arith.constant 0 : index
    %c0_17 = arith.constant 0 : index
    %12 = vector.load %arg2[%c0_15, %c3, %c0_16, %c0_17] : memref<1x4x2x128xf32, #tpu.memory_space<vmem>>, vector<1x1x2x128xf32>
    %13 = vector.shape_cast %12 : vector<1x1x2x128xf32> to vector<2x128xf32>
    %14 = arith.maximumf %11, %13 : vector<2x128xf32>
    %c0_18 = arith.constant 0 : index
    %c0_19 = arith.constant 0 : index
    %c0_20 = arith.constant 0 : index
    %c0_21 = arith.constant 0 : index
    %15 = vector.load %arg2[%c0_18, %c0_19, %c0_20, %c0_21] : memref<1x4x2x128xf32, #tpu.memory_space<vmem>>, vector<1x1x2x128xf32>
    %16 = vector.shape_cast %15 : vector<1x1x2x128xf32> to vector<2x128xf32>
    %17 = arith.subf %16, %14 : vector<2x128xf32>
    %18 = math.exp %17 : vector<2x128xf32>
    %c0_22 = arith.constant 0 : index
    %c1_23 = arith.constant 1 : index
    %c0_24 = arith.constant 0 : index
    %c0_25 = arith.constant 0 : index
    %19 = vector.load %arg2[%c0_22, %c1_23, %c0_24, %c0_25] : memref<1x4x2x128xf32, #tpu.memory_space<vmem>>, vector<1x1x2x128xf32>
    %20 = vector.shape_cast %19 : vector<1x1x2x128xf32> to vector<2x128xf32>
    %21 = arith.subf %20, %14 : vector<2x128xf32>
    %22 = math.exp %21 : vector<2x128xf32>
    %23 = arith.addf %18, %22 : vector<2x128xf32>
    %c0_26 = arith.constant 0 : index
    %c2_27 = arith.constant 2 : index
    %c0_28 = arith.constant 0 : index
    %c0_29 = arith.constant 0 : index
    %24 = vector.load %arg2[%c0_26, %c2_27, %c0_28, %c0_29] : memref<1x4x2x128xf32, #tpu.memory_space<vmem>>, vector<1x1x2x128xf32>
    %25 = vector.shape_cast %24 : vector<1x1x2x128xf32> to vector<2x128xf32>
    %26 = arith.subf %25, %14 : vector<2x128xf32>
    %27 = math.exp %26 : vector<2x128xf32>
    %28 = arith.addf %23, %27 : vector<2x128xf32>
    %c0_30 = arith.constant 0 : index
    %c3_31 = arith.constant 3 : index
    %c0_32 = arith.constant 0 : index
    %c0_33 = arith.constant 0 : index
    %29 = vector.load %arg2[%c0_30, %c3_31, %c0_32, %c0_33] : memref<1x4x2x128xf32, #tpu.memory_space<vmem>>, vector<1x1x2x128xf32>
    %30 = vector.shape_cast %29 : vector<1x1x2x128xf32> to vector<2x128xf32>
    %31 = arith.subf %30, %14 : vector<2x128xf32>
    %32 = math.exp %31 : vector<2x128xf32>
    %33 = arith.addf %28, %32 : vector<2x128xf32>
    %34 = tpu.reciprocal %33 {approx = true} : vector<2x128xf32> -> vector<2x128xf32>
    %35 = arith.mulf %33, %34 : vector<2x128xf32>
    %cst = arith.constant 2.000000e+00 : f32
    %36 = vector.broadcast %cst : f32 to vector<2x128xf32>
    %37 = arith.subf %36, %35 : vector<2x128xf32>
    %38 = arith.mulf %34, %37 : vector<2x128xf32>
    %cst_34 = arith.constant 0.000000e+00 : f32
    %39 = vector.broadcast %cst_34 : f32 to vector<2x128xf32>
    %c0_35 = arith.constant 0 : index
    %c0_36 = arith.constant 0 : index
    %c0_37 = arith.constant 0 : index
    %c0_38 = arith.constant 0 : index
    %40 = vector.load %arg2[%c0_35, %c0_36, %c0_37, %c0_38] : memref<1x4x2x128xf32, #tpu.memory_space<vmem>>, vector<1x1x2x128xf32>
    %41 = vector.shape_cast %40 : vector<1x1x2x128xf32> to vector<2x128xf32>
    %42 = arith.subf %41, %14 : vector<2x128xf32>
    %43 = math.exp %42 : vector<2x128xf32>
    %44 = arith.mulf %43, %38 : vector<2x128xf32>
    %c0_i32 = arith.constant 0 : i32
    %45 = vector.broadcast %c0_i32 : i32 to vector<2x128xi32>
    %46 = arith.cmpi eq, %1, %45 : vector<2x128xi32>
    %47 = arith.extui %46 : vector<2x128xi1> to vector<2x128xi32>
    %48 = arith.sitofp %47 : vector<2x128xi32> to vector<2x128xf32>
    %49 = arith.mulf %48, %44 : vector<2x128xf32>
    %cst_39 = arith.constant dense<0.000000e+00> : vector<128xf32>
    %50 = vector.multi_reduction <add>, %49, %cst_39 [0] : vector<2x128xf32> to vector<128xf32>
    %c0_40 = arith.constant 0 : index
    %c0_41 = arith.constant 0 : index
    %c0_42 = arith.constant 0 : index
    %c0_43 = arith.constant 0 : index
    %51 = vector.load %arg5[%c0_40, %c0_41, %c0_42, %c0_43] : memref<1x1x4x128xf32, #tpu.memory_space<vmem>>, vector<1x1x1x128xf32>
    %52 = vector.shape_cast %51 : vector<1x1x1x128xf32> to vector<128xf32>
    %53 = vector.shape_cast %50 : vector<128xf32> to vector<1x1x1x128xf32>
    tpu.vector_store %arg5[%c0_40, %c0_41, %c0_42, %c0_43], %53 {strides = array<i32>} : memref<1x1x4x128xf32, #tpu.memory_space<vmem>>, vector<1x1x1x128xf32>,
    %cst_44 = arith.constant dense<0.000000e+00> : vector<128xf32>
    %54 = vector.multi_reduction <add>, %44, %cst_44 [0] : vector<2x128xf32> to vector<128xf32>
    %c0_45 = arith.constant 0 : index
    %c0_46 = arith.constant 0 : index
    %c0_47 = arith.constant 0 : index
    %c0_48 = arith.constant 0 : index
    %55 = vector.load %arg6[%c0_45, %c0_46, %c0_47, %c0_48] : memref<1x1x4x128xf32, #tpu.memory_space<vmem>>, vector<1x1x1x128xf32>
    %56 = vector.shape_cast %55 : vector<1x1x1x128xf32> to vector<128xf32>
    %57 = vector.shape_cast %54 : vector<128xf32> to vector<1x1x1x128xf32>
    tpu.vector_store %arg6[%c0_45, %c0_46, %c0_47, %c0_48], %57 {strides = array<i32>} : memref<1x1x4x128xf32, #tpu.memory_space<vmem>>, vector<1x1x1x128xf32>,
    %cst_49 = arith.constant dense<0.000000e+00> : vector<128xf32>
    %58 = vector.multi_reduction <add>, %48, %cst_49 [0] : vector<2x128xf32> to vector<128xf32>
    %c0_50 = arith.constant 0 : index
    %c0_51 = arith.constant 0 : index
    %c0_52 = arith.constant 0 : index
    %c0_53 = arith.constant 0 : index
    %59 = vector.load %arg7[%c0_50, %c0_51, %c0_52, %c0_53] : memref<1x1x4x128xf32, #tpu.memory_space<vmem>>, vector<1x1x1x128xf32>
    %60 = vector.shape_cast %59 : vector<1x1x1x128xf32> to vector<128xf32>
    %61 = vector.shape_cast %58 : vector<128xf32> to vector<1x1x1x128xf32>
    tpu.vector_store %arg7[%c0_50, %c0_51, %c0_52, %c0_53], %61 {strides = array<i32>} : memref<1x1x4x128xf32, #tpu.memory_space<vmem>>, vector<1x1x1x128xf32>,
    %62 = arith.mulf %48, %41 : vector<2x128xf32>
    %63 = arith.addf %39, %62 : vector<2x128xf32>
    %c0_54 = arith.constant 0 : index
    %c1_55 = arith.constant 1 : index
    %c0_56 = arith.constant 0 : index
    %c0_57 = arith.constant 0 : index
    %64 = vector.load %arg2[%c0_54, %c1_55, %c0_56, %c0_57] : memref<1x4x2x128xf32, #tpu.memory_space<vmem>>, vector<1x1x2x128xf32>
    %65 = vector.shape_cast %64 : vector<1x1x2x128xf32> to vector<2x128xf32>
    %66 = arith.subf %65, %14 : vector<2x128xf32>
    %67 = math.exp %66 : vector<2x128xf32>
    %68 = arith.mulf %67, %38 : vector<2x128xf32>
    %c1_i32 = arith.constant 1 : i32
    %69 = vector.broadcast %c1_i32 : i32 to vector<2x128xi32>
    %70 = arith.cmpi eq, %1, %69 : vector<2x128xi32>
    %71 = arith.extui %70 : vector<2x128xi1> to vector<2x128xi32>
    %72 = arith.sitofp %71 : vector<2x128xi32> to vector<2x128xf32>
    %73 = arith.mulf %72, %68 : vector<2x128xf32>
    %cst_58 = arith.constant dense<0.000000e+00> : vector<128xf32>
    %74 = vector.multi_reduction <add>, %73, %cst_58 [0] : vector<2x128xf32> to vector<128xf32>
    %c0_59 = arith.constant 0 : index
    %c0_60 = arith.constant 0 : index
    %c1_61 = arith.constant 1 : index
    %c0_62 = arith.constant 0 : index
    %75 = vector.load %arg5[%c0_59, %c0_60, %c1_61, %c0_62] : memref<1x1x4x128xf32, #tpu.memory_space<vmem>>, vector<1x1x1x128xf32>
    %76 = vector.shape_cast %75 : vector<1x1x1x128xf32> to vector<128xf32>
    %77 = vector.shape_cast %74 : vector<128xf32> to vector<1x1x1x128xf32>
    tpu.vector_store %arg5[%c0_59, %c0_60, %c1_61, %c0_62], %77 {strides = array<i32>} : memref<1x1x4x128xf32, #tpu.memory_space<vmem>>, vector<1x1x1x128xf32>,
    %cst_63 = arith.constant dense<0.000000e+00> : vector<128xf32>
    %78 = vector.multi_reduction <add>, %68, %cst_63 [0] : vector<2x128xf32> to vector<128xf32>
    %c0_64 = arith.constant 0 : index
    %c0_65 = arith.constant 0 : index
    %c1_66 = arith.constant 1 : index
    %c0_67 = arith.constant 0 : index
    %79 = vector.load %arg6[%c0_64, %c0_65, %c1_66, %c0_67] : memref<1x1x4x128xf32, #tpu.memory_space<vmem>>, vector<1x1x1x128xf32>
    %80 = vector.shape_cast %79 : vector<1x1x1x128xf32> to vector<128xf32>
    %81 = vector.shape_cast %78 : vector<128xf32> to vector<1x1x1x128xf32>
    tpu.vector_store %arg6[%c0_64, %c0_65, %c1_66, %c0_67], %81 {strides = array<i32>} : memref<1x1x4x128xf32, #tpu.memory_space<vmem>>, vector<1x1x1x128xf32>,
    %cst_68 = arith.constant dense<0.000000e+00> : vector<128xf32>
    %82 = vector.multi_reduction <add>, %72, %cst_68 [0] : vector<2x128xf32> to vector<128xf32>
    %c0_69 = arith.constant 0 : index
    %c0_70 = arith.constant 0 : index
    %c1_71 = arith.constant 1 : index
    %c0_72 = arith.constant 0 : index
    %83 = vector.load %arg7[%c0_69, %c0_70, %c1_71, %c0_72] : memref<1x1x4x128xf32, #tpu.memory_space<vmem>>, vector<1x1x1x128xf32>
    %84 = vector.shape_cast %83 : vector<1x1x1x128xf32> to vector<128xf32>
    %85 = vector.shape_cast %82 : vector<128xf32> to vector<1x1x1x128xf32>
    tpu.vector_store %arg7[%c0_69, %c0_70, %c1_71, %c0_72], %85 {strides = array<i32>} : memref<1x1x4x128xf32, #tpu.memory_space<vmem>>, vector<1x1x1x128xf32>,
    %86 = arith.mulf %72, %65 : vector<2x128xf32>
    %87 = arith.addf %63, %86 : vector<2x128xf32>
    %c0_73 = arith.constant 0 : index
    %c2_74 = arith.constant 2 : index
    %c0_75 = arith.constant 0 : index
    %c0_76 = arith.constant 0 : index
    %88 = vector.load %arg2[%c0_73, %c2_74, %c0_75, %c0_76] : memref<1x4x2x128xf32, #tpu.memory_space<vmem>>, vector<1x1x2x128xf32>
    %89 = vector.shape_cast %88 : vector<1x1x2x128xf32> to vector<2x128xf32>
    %90 = arith.subf %89, %14 : vector<2x128xf32>
    %91 = math.exp %90 : vector<2x128xf32>
    %92 = arith.mulf %91, %38 : vector<2x128xf32>
    %c2_i32 = arith.constant 2 : i32
    %93 = vector.broadcast %c2_i32 : i32 to vector<2x128xi32>
    %94 = arith.cmpi eq, %1, %93 : vector<2x128xi32>
    %95 = arith.extui %94 : vector<2x128xi1> to vector<2x128xi32>
    %96 = arith.sitofp %95 : vector<2x128xi32> to vector<2x128xf32>
    %97 = arith.mulf %96, %92 : vector<2x128xf32>
    %cst_77 = arith.constant dense<0.000000e+00> : vector<128xf32>
    %98 = vector.multi_reduction <add>, %97, %cst_77 [0] : vector<2x128xf32> to vector<128xf32>
    %c0_78 = arith.constant 0 : index
    %c0_79 = arith.constant 0 : index
    %c2_80 = arith.constant 2 : index
    %c0_81 = arith.constant 0 : index
    %99 = vector.load %arg5[%c0_78, %c0_79, %c2_80, %c0_81] : memref<1x1x4x128xf32, #tpu.memory_space<vmem>>, vector<1x1x1x128xf32>
    %100 = vector.shape_cast %99 : vector<1x1x1x128xf32> to vector<128xf32>
    %101 = vector.shape_cast %98 : vector<128xf32> to vector<1x1x1x128xf32>
    tpu.vector_store %arg5[%c0_78, %c0_79, %c2_80, %c0_81], %101 {strides = array<i32>} : memref<1x1x4x128xf32, #tpu.memory_space<vmem>>, vector<1x1x1x128xf32>,
    %cst_82 = arith.constant dense<0.000000e+00> : vector<128xf32>
    %102 = vector.multi_reduction <add>, %92, %cst_82 [0] : vector<2x128xf32> to vector<128xf32>
    %c0_83 = arith.constant 0 : index
    %c0_84 = arith.constant 0 : index
    %c2_85 = arith.constant 2 : index
    %c0_86 = arith.constant 0 : index
    %103 = vector.load %arg6[%c0_83, %c0_84, %c2_85, %c0_86] : memref<1x1x4x128xf32, #tpu.memory_space<vmem>>, vector<1x1x1x128xf32>
    %104 = vector.shape_cast %103 : vector<1x1x1x128xf32> to vector<128xf32>
    %105 = vector.shape_cast %102 : vector<128xf32> to vector<1x1x1x128xf32>
    tpu.vector_store %arg6[%c0_83, %c0_84, %c2_85, %c0_86], %105 {strides = array<i32>} : memref<1x1x4x128xf32, #tpu.memory_space<vmem>>, vector<1x1x1x128xf32>,
    %cst_87 = arith.constant dense<0.000000e+00> : vector<128xf32>
    %106 = vector.multi_reduction <add>, %96, %cst_87 [0] : vector<2x128xf32> to vector<128xf32>
    %c0_88 = arith.constant 0 : index
    %c0_89 = arith.constant 0 : index
    %c2_90 = arith.constant 2 : index
    %c0_91 = arith.constant 0 : index
    %107 = vector.load %arg7[%c0_88, %c0_89, %c2_90, %c0_91] : memref<1x1x4x128xf32, #tpu.memory_space<vmem>>, vector<1x1x1x128xf32>
    %108 = vector.shape_cast %107 : vector<1x1x1x128xf32> to vector<128xf32>
    %109 = vector.shape_cast %106 : vector<128xf32> to vector<1x1x1x128xf32>
    tpu.vector_store %arg7[%c0_88, %c0_89, %c2_90, %c0_91], %109 {strides = array<i32>} : memref<1x1x4x128xf32, #tpu.memory_space<vmem>>, vector<1x1x1x128xf32>,
    %110 = arith.mulf %96, %89 : vector<2x128xf32>
    %111 = arith.addf %87, %110 : vector<2x128xf32>
    %c0_92 = arith.constant 0 : index
    %c3_93 = arith.constant 3 : index
    %c0_94 = arith.constant 0 : index
    %c0_95 = arith.constant 0 : index
    %112 = vector.load %arg2[%c0_92, %c3_93, %c0_94, %c0_95] : memref<1x4x2x128xf32, #tpu.memory_space<vmem>>, vector<1x1x2x128xf32>
    %113 = vector.shape_cast %112 : vector<1x1x2x128xf32> to vector<2x128xf32>
    %114 = arith.subf %113, %14 : vector<2x128xf32>
    %115 = math.exp %114 : vector<2x128xf32>
    %116 = arith.mulf %115, %38 : vector<2x128xf32>
    %c3_i32 = arith.constant 3 : i32
    %117 = vector.broadcast %c3_i32 : i32 to vector<2x128xi32>
    %118 = arith.cmpi eq, %1, %117 : vector<2x128xi32>
    %119 = arith.extui %118 : vector<2x128xi1> to vector<2x128xi32>
    %120 = arith.sitofp %119 : vector<2x128xi32> to vector<2x128xf32>
    %121 = arith.mulf %120, %116 : vector<2x128xf32>
    %cst_96 = arith.constant dense<0.000000e+00> : vector<128xf32>
    %122 = vector.multi_reduction <add>, %121, %cst_96 [0] : vector<2x128xf32> to vector<128xf32>
    %c0_97 = arith.constant 0 : index
    %c0_98 = arith.constant 0 : index
    %c3_99 = arith.constant 3 : index
    %c0_100 = arith.constant 0 : index
    %123 = vector.load %arg5[%c0_97, %c0_98, %c3_99, %c0_100] : memref<1x1x4x128xf32, #tpu.memory_space<vmem>>, vector<1x1x1x128xf32>
    %124 = vector.shape_cast %123 : vector<1x1x1x128xf32> to vector<128xf32>
    %125 = vector.shape_cast %122 : vector<128xf32> to vector<1x1x1x128xf32>
    tpu.vector_store %arg5[%c0_97, %c0_98, %c3_99, %c0_100], %125 {strides = array<i32>} : memref<1x1x4x128xf32, #tpu.memory_space<vmem>>, vector<1x1x1x128xf32>,
    %cst_101 = arith.constant dense<0.000000e+00> : vector<128xf32>
    %126 = vector.multi_reduction <add>, %116, %cst_101 [0] : vector<2x128xf32> to vector<128xf32>
    %c0_102 = arith.constant 0 : index
    %c0_103 = arith.constant 0 : index
    %c3_104 = arith.constant 3 : index
    %c0_105 = arith.constant 0 : index
    %127 = vector.load %arg6[%c0_102, %c0_103, %c3_104, %c0_105] : memref<1x1x4x128xf32, #tpu.memory_space<vmem>>, vector<1x1x1x128xf32>
    %128 = vector.shape_cast %127 : vector<1x1x1x128xf32> to vector<128xf32>
    %129 = vector.shape_cast %126 : vector<128xf32> to vector<1x1x1x128xf32>
    tpu.vector_store %arg6[%c0_102, %c0_103, %c3_104, %c0_105], %129 {strides = array<i32>} : memref<1x1x4x128xf32, #tpu.memory_space<vmem>>, vector<1x1x1x128xf32>,
    %cst_106 = arith.constant dense<0.000000e+00> : vector<128xf32>
    %130 = vector.multi_reduction <add>, %120, %cst_106 [0] : vector<2x128xf32> to vector<128xf32>
    %c0_107 = arith.constant 0 : index
    %c0_108 = arith.constant 0 : index
    %c3_109 = arith.constant 3 : index
    %c0_110 = arith.constant 0 : index
    %131 = vector.load %arg7[%c0_107, %c0_108, %c3_109, %c0_110] : memref<1x1x4x128xf32, #tpu.memory_space<vmem>>, vector<1x1x1x128xf32>
    %132 = vector.shape_cast %131 : vector<1x1x1x128xf32> to vector<128xf32>
    %133 = vector.shape_cast %130 : vector<128xf32> to vector<1x1x1x128xf32>
    tpu.vector_store %arg7[%c0_107, %c0_108, %c3_109, %c0_110], %133 {strides = array<i32>} : memref<1x1x4x128xf32, #tpu.memory_space<vmem>>, vector<1x1x1x128xf32>,
    %134 = arith.mulf %120, %113 : vector<2x128xf32>
    %135 = arith.addf %111, %134 : vector<2x128xf32>
    %136 = math.log %33 : vector<2x128xf32>
    %137 = arith.addf %136, %14 : vector<2x128xf32>
    %138 = arith.subf %137, %135 : vector<2x128xf32>
    %139 = arith.mulf %138, %3 : vector<2x128xf32>
    %cst_111 = arith.constant dense<0.000000e+00> : vector<128xf32>
    %140 = vector.multi_reduction <add>, %139, %cst_111 [0] : vector<2x128xf32> to vector<128xf32>
    %141 = vector.shape_cast %140 : vector<128xf32> to vector<1x128xf32>
    %c0_112 = arith.constant 0 : index
    %c0_113 = arith.constant 0 : index
    %c0_114 = arith.constant 0 : index
    %c0_115 = arith.constant 0 : index
    %142 = vector.load %arg8[%c0_112, %c0_113, %c0_114, %c0_115] : memref<1x1x1x128xf32, #tpu.memory_space<vmem>>, vector<1x1x1x128xf32>
    %143 = vector.shape_cast %142 : vector<1x1x1x128xf32> to vector<1x128xf32>
    %144 = vector.shape_cast %141 : vector<1x128xf32> to vector<1x1x1x128xf32>
    tpu.vector_store %arg8[%c0_112, %c0_113, %c0_114, %c0_115], %144 {strides = array<i32>} : memref<1x1x1x128xf32, #tpu.memory_space<vmem>>, vector<1x1x1x128xf32>,
    return
  }
  func.func @transform_0(%arg0: i32, %arg1: i32) -> (i32, i32, i32, i32) {
    %c0_i32 = arith.constant 0 : i32
    %c0_i32_0 = arith.constant 0 : i32
    %c0_i32_1 = arith.constant 0 : i32
    return %arg0, %c0_i32, %arg1, %c0_i32_0 : i32, i32, i32, i32
  }
  func.func @transform_1(%arg0: i32, %arg1: i32) -> (i32, i32, i32) {
    %c0_i32 = arith.constant 0 : i32
    %c0_i32_0 = arith.constant 0 : i32
    return %arg0, %arg1, %c0_i32 : i32, i32, i32
  }
  func.func @transform_2(%arg0: i32, %arg1: i32) -> (i32, i32, i32) {
    %c0_i32 = arith.constant 0 : i32
    %c0_i32_0 = arith.constant 0 : i32
    return %arg0, %arg1, %c0_i32 : i32, i32, i32
  }
  func.func @transform_3(%arg0: i32, %arg1: i32) -> (i32, i32, i32, i32) {
    %c0_i32 = arith.constant 0 : i32
    %c0_i32_0 = arith.constant 0 : i32
    %c0_i32_1 = arith.constant 0 : i32
    return %arg0, %arg1, %c0_i32, %c0_i32_0 : i32, i32, i32, i32
  }
  func.func @transform_4(%arg0: i32, %arg1: i32) -> (i32, i32, i32, i32) {
    %c0_i32 = arith.constant 0 : i32
    %c0_i32_0 = arith.constant 0 : i32
    %c0_i32_1 = arith.constant 0 : i32
    return %arg0, %arg1, %c0_i32, %c0_i32_0 : i32, i32, i32, i32
  }
  func.func @transform_5(%arg0: i32, %arg1: i32) -> (i32, i32, i32, i32) {
    %c0_i32 = arith.constant 0 : i32
    %c0_i32_0 = arith.constant 0 : i32
    %c0_i32_1 = arith.constant 0 : i32
    return %arg0, %arg1, %c0_i32, %c0_i32_0 : i32, i32, i32, i32
  }
  func.func @transform_6(%arg0: i32, %arg1: i32) -> (i32, i32, i32, i32) {
    %c0_i32 = arith.constant 0 : i32
    %c0_i32_0 = arith.constant 0 : i32
    %c0_i32_1 = arith.constant 0 : i32
    return %arg0, %arg1, %c0_i32, %c0_i32_0 : i32, i32, i32, i32
  }
}

</mosaic_0001>

<llo_original>
// kernel: tpu_custom_call.1
$region0: #{tpu_custom_call.1}
  #allocation0 [shape = 'u32[]', space=smem, size = 0x4, offset = 0x4, fixed_abs, tag = 'smem constant byte address 0x4 - core index']
  #allocation1 [shape = 'u32[144,128]{1,0:T(1,128)}', space=vmem, size = 0x12000, scoped, tag = 'internal scratch']
  %s0 = inlined_call_operand.hbm [shape: f32[2,4,2,128], index: 0, kind: input, shape index: {}]
  %s1 = inlined_call_operand.hbm [shape: s32[2,2,128], index: 1, kind: input, shape index: {}]
  %s2 = inlined_call_operand.vmem [shape: f32[2,2,128], index: 2, kind: input, shape index: {}]
  %s3 = inlined_call_operand.hbm [shape: f32[2,1,4,128], index: 3, kind: output, shape index: {0}]
  %s4 = inlined_call_operand.hbm [shape: f32[2,1,4,128], index: 4, kind: output, shape index: {1}]
  %s5 = inlined_call_operand.hbm [shape: f32[2,1,4,128], index: 5, kind: output, shape index: {2}]
  %s6 = inlined_call_operand.hbm [shape: f32[2,1,1,128], index: 6, kind: output, shape index: {3}]
  %7 = xla_tuple %s3, %s4, %s5, %s6
  %s8 = sld [smem:[#allocation0]]
  $region77: #{tpu_custom_call.1} parent=0
    _
  %s10 = ssub.s32 1, %s8
  %s11 = scalar_select 0, %s10, %s8
  $region1: #{tpu_custom_call.1} parent=0
    #allocation2 [shape = 'u8[8192]{0}', space=vmem, size = 0x2000, scoped, tag = 'input window, operand 0']
    #allocation3 [shape = 's32[2]{0}', space=sflag, size = 0x8, scoped, tag = 'scoped memory for tpu_custom_call.1']
    #allocation4 [shape = 's32[2]{0}', space=sflag, size = 0x8, scoped, tag = 'scoped memory for tpu_custom_call.1']
    #allocation5 [shape = 'u8[2048]{0}', space=vmem, size = 0x800, scoped, tag = 'input window, operand 1']
    #allocation6 [shape = 's32[2]{0}', space=sflag, size = 0x8, scoped, tag = 'scoped memory for tpu_custom_call.1']
    #allocation7 [shape = 'u8[4096]{0}', space=vmem, size = 0x1000, scoped, tag = 'output window, operand 0']
    #allocation8 [shape = 'u8[4096]{0}', space=vmem, size = 0x1000, scoped, tag = 'output window, operand 1']
    #allocation9 [shape = 's32[2]{0}', space=sflag, size = 0x8, scoped, tag = 'scoped memory for tpu_custom_call.1']
    #allocation10 [shape = 'u8[4096]{0}', space=vmem, size = 0x1000, scoped, tag = 'output window, operand 2']
    #allocation11 [shape = 'u8[1024]{0}', space=vmem, size = 0x400, scoped, tag = 'output window, operand 3']
    #allocation12 [shape = 's32[2]{0}', space=sflag, size = 0x8, scoped, tag = 'scoped memory for tpu_custom_call.1']
    %12 = vsyncpa [#allocation3], 0
    %s13 = scalar_lea.sflag [#allocation3], 1
    %14 = vsyncpa %s13, 0
    %15 = vsyncpa [#allocation6], 0
    %s16 = scalar_lea.sflag [#allocation6], 1
    %17 = vsyncpa %s16, 0
    %18 = vsyncpa [#allocation4], 0
    %s19 = scalar_lea.sflag [#allocation4], 1
    %20 = vsyncpa %s19, 0
    %21 = vsyncpa [#allocation9], 0
    %s22 = scalar_lea.sflag [#allocation9], 1
    %23 = vsyncpa %s22, 0
    %24 = vsyncpa [#allocation12], 0
    %s25 = scalar_lea.sflag [#allocation12], 1
    %26 = vsyncpa %s25, 0
    loop: start=0, step=1, limit=4
    $region2: #{tpu_custom_call.1} parent=1 // loop_pre_header
      _
    $region3: #{tpu_custom_call.1} parent=1 // loop_header
      %s28 = sphi 0, %s32
      %p29 = scmp.ge.s32.totalorder %s28, 4
      %s35 = sphi 0, %s47
      %s36 = sphi 0, %s43
      %s37 = sphi 0, %s35
      %s38 = sphi 0, %s36
      %s39 = sphi 0, %s37
      %s40 = sphi 0, %s38
      %s52 = sphi 0, %s54
      %s55 = sphi 0, %s52
      %s56 = sphi 0, %s55
      %s72 = sphi 0, %s56
      %s80 = sphi 0, %s82
      %s83 = sphi 0, %s80
      %s84 = sphi 0, %s83
      %s100 = sphi 0, %s84
      %s108 = sphi 0, %s110
      %s111 = sphi 0, %s108
      %s112 = sphi 0, %s111
      %s128 = sphi 0, %s112
      %s136 = sphi 0, %s138
      %s139 = sphi 0, %s136
      %s140 = sphi 0, %s139
      %s156 = sphi 0, %s140
      %s164 = sphi 0, %s166
      %s167 = sphi 0, %s164
      %s168 = sphi 0, %s167
      %s184 = sphi 0, %s168
      %s192 = sphi 0, %s194
      %s195 = sphi 0, %s192
      %s196 = sphi 0, %s195
      %s212 = sphi 0, %s196
      %s220 = sphi 0, %s222
      %s223 = sphi 0, %s220
      %s224 = sphi 0, %s223
      %s240 = sphi 0, %s224
    $region4: #{tpu_custom_call.1} parent=1 // loop_header_branch
      %31 = sbr.rel (%p29) target = $region8
    $region5: #{tpu_custom_call.1} parent=1 // loop_body
      %s33 = ssub.s32 %s28, 1
      %s34 = ssub.s32 %s28, 2
      %s41 = sadd.s32 1, %s36
      %p42 = scmp.ge.s32.totalorder %s41, 1
      %s43 = scalar_select %p42, 0, %s41
      %s44 = sadd.s32 1, %s35
      %s45 = scalar_select %p42, %s44, %s35
      %p46 = scmp.ge.s32.totalorder %s45, 2
      %s47 = scalar_select %p46, 0, %s45
      %s48 = ssub.s32 %s35, %s47
      %s49 = ssub.s32 %s36, %s43
      %s50 = sor.u32 %s48, %s49
      %p51 = scmp.eq.s32.totalorder %s50, 0
      %s53 = sadd.s32 %s52, 1
      %s54 = scalar_select %p51, %s52, %s53
      %p57 = pneg %p51
      %p58 = scmp.eq.s32.totalorder %s28, 1
      %p59 = por %p57, %p58
      %p60 = scmp.ne.s32.totalorder %s52, %s55
      %p61 = scmp.eq.s32.totalorder %s28, 0
      %p62 = por %p60, %p61
      %p63 = scmp.ne.s32.totalorder %s52, %s55
      %p64 = scmp.eq.s32.totalorder %s33, 1
      %p65 = por %p63, %p64
      %p66 = scmp.ne.s32.totalorder %s55, %s56
      %p67 = scmp.eq.s32.totalorder %s33, 0
      %p68 = por %p66, %p67
      %p69 = scmp.ne.s32.totalorder %s55, %s56
      %p70 = scmp.eq.s32.totalorder %s34, 1
      %p71 = por %p69, %p70
      %p73 = scmp.ne.s32.totalorder %s56, %s72
      %p74 = scmp.eq.s32.totalorder %s34, 0
      %p75 = por %p73, %p74
      %s76 = ssub.s32 %s35, %s47
      %s77 = ssub.s32 %s36, %s43
      %s78 = sor.u32 %s76, %s77
      %p79 = scmp.eq.s32.totalorder %s78, 0
      %s81 = sadd.s32 %s80, 1
      %s82 = scalar_select %p79, %s80, %s81
      %p85 = pneg %p79
      %p86 = scmp.eq.s32.totalorder %s28, 1
      %p87 = por %p85, %p86
      %p88 = scmp.ne.s32.totalorder %s80, %s83
      %p89 = scmp.eq.s32.totalorder %s28, 0
      %p90 = por %p88, %p89
      %p91 = scmp.ne.s32.totalorder %s80, %s83
      %p92 = scmp.eq.s32.totalorder %s33, 1
      %p93 = por %p91, %p92
      %p94 = scmp.ne.s32.totalorder %s83, %s84
      %p95 = scmp.eq.s32.totalorder %s33, 0
      %p96 = por %p94, %p95
      %p97 = scmp.ne.s32.totalorder %s83, %s84
      %p98 = scmp.eq.s32.totalorder %s34, 1
      %p99 = por %p97, %p98
      %p101 = scmp.ne.s32.totalorder %s84, %s100
      %p102 = scmp.eq.s32.totalorder %s34, 0
      %p103 = por %p101, %p102
      %s104 = ssub.s32 %s35, %s47
      %s105 = ssub.s32 %s36, %s43
      %s106 = sor.u32 %s104, %s105
      %p107 = scmp.eq.s32.totalorder %s106, 0
      %s109 = sadd.s32 %s108, 1
      %s110 = scalar_select %p107, %s108, %s109
      %p113 = pneg %p107
      %p114 = scmp.eq.s32.totalorder %s28, 1
      %p115 = por %p113, %p114
      %p116 = scmp.ne.s32.totalorder %s108, %s111
      %p117 = scmp.eq.s32.totalorder %s28, 0
      %p118 = por %p116, %p117
      %p119 = scmp.ne.s32.totalorder %s108, %s111
      %p120 = scmp.eq.s32.totalorder %s33, 1
      %p121 = por %p119, %p120
      %p122 = scmp.ne.s32.totalorder %s111, %s112
      %p123 = scmp.eq.s32.totalorder %s33, 0
      %p124 = por %p122, %p123
      %p125 = scmp.ne.s32.totalorder %s111, %s112
      %p126 = scmp.eq.s32.totalorder %s34, 1
      %p127 = por %p125, %p126
      %p129 = scmp.ne.s32.totalorder %s112, %s128
      %p130 = scmp.eq.s32.totalorder %s34, 0
      %p131 = por %p129, %p130
      %s132 = ssub.s32 %s35, %s47
      %s133 = ssub.s32 %s36, %s43
      %s134 = sor.u32 %s132, %s133
      %p135 = scmp.eq.s32.totalorder %s134, 0
      %s137 = sadd.s32 %s136, 1
      %s138 = scalar_select %p135, %s136, %s137
      %p141 = pneg %p135
      %p142 = scmp.eq.s32.totalorder %s28, 1
      %p143 = por %p141, %p142
      %p144 = scmp.ne.s32.totalorder %s136, %s139
      %p145 = scmp.eq.s32.totalorder %s28, 0
      %p146 = por %p144, %p145
      %p147 = scmp.ne.s32.totalorder %s136, %s139
      %p148 = scmp.eq.s32.totalorder %s33, 1
      %p149 = por %p147, %p148
      %p150 = scmp.ne.s32.totalorder %s139, %s140
      %p151 = scmp.eq.s32.totalorder %s33, 0
      %p152 = por %p150, %p151
      %p153 = scmp.ne.s32.totalorder %s139, %s140
      %p154 = scmp.eq.s32.totalorder %s34, 1
      %p155 = por %p153, %p154
      %p157 = scmp.ne.s32.totalorder %s140, %s156
      %p158 = scmp.eq.s32.totalorder %s34, 0
      %p159 = por %p157, %p158
      %s160 = ssub.s32 %s35, %s47
      %s161 = ssub.s32 %s36, %s43
      %s162 = sor.u32 %s160, %s161
      %p163 = scmp.eq.s32.totalorder %s162, 0
      %s165 = sadd.s32 %s164, 1
      %s166 = scalar_select %p163, %s164, %s165
      %p169 = pneg %p163
      %p170 = scmp.eq.s32.totalorder %s28, 1
      %p171 = por %p169, %p170
      %p172 = scmp.ne.s32.totalorder %s164, %s167
      %p173 = scmp.eq.s32.totalorder %s28, 0
      %p174 = por %p172, %p173
      %p175 = scmp.ne.s32.totalorder %s164, %s167
      %p176 = scmp.eq.s32.totalorder %s33, 1
      %p177 = por %p175, %p176
      %p178 = scmp.ne.s32.totalorder %s167, %s168
      %p179 = scmp.eq.s32.totalorder %s33, 0
      %p180 = por %p178, %p179
      %p181 = scmp.ne.s32.totalorder %s167, %s168
      %p182 = scmp.eq.s32.totalorder %s34, 1
      %p183 = por %p181, %p182
      %p185 = scmp.ne.s32.totalorder %s168, %s184
      %p186 = scmp.eq.s32.totalorder %s34, 0
      %p187 = por %p185, %p186
      %s188 = ssub.s32 %s35, %s47
      %s189 = ssub.s32 %s36, %s43
      %s190 = sor.u32 %s188, %s189
      %p191 = scmp.eq.s32.totalorder %s190, 0
      %s193 = sadd.s32 %s192, 1
      %s194 = scalar_select %p191, %s192, %s193
      %p197 = pneg %p191
      %p198 = scmp.eq.s32.totalorder %s28, 1
      %p199 = por %p197, %p198
      %p200 = scmp.ne.s32.totalorder %s192, %s195
      %p201 = scmp.eq.s32.totalorder %s28, 0
      %p202 = por %p200, %p201
      %p203 = scmp.ne.s32.totalorder %s192, %s195
      %p204 = scmp.eq.s32.totalorder %s33, 1
      %p205 = por %p203, %p204
      %p206 = scmp.ne.s32.totalorder %s195, %s196
      %p207 = scmp.eq.s32.totalorder %s33, 0
      %p208 = por %p206, %p207
      %p209 = scmp.ne.s32.totalorder %s195, %s196
      %p210 = scmp.eq.s32.totalorder %s34, 1
      %p211 = por %p209, %p210
      %p213 = scmp.ne.s32.totalorder %s196, %s212
      %p214 = scmp.eq.s32.totalorder %s34, 0
      %p215 = por %p213, %p214
      %s216 = ssub.s32 %s35, %s47
      %s217 = ssub.s32 %s36, %s43
      %s218 = sor.u32 %s216, %s217
      %p219 = scmp.eq.s32.totalorder %s218, 0
      %s221 = sadd.s32 %s220, 1
      %s222 = scalar_select %p219, %s220, %s221
      %p225 = pneg %p219
      %p226 = scmp.eq.s32.totalorder %s28, 1
      %p227 = por %p225, %p226
      %p228 = scmp.ne.s32.totalorder %s220, %s223
      %p229 = scmp.eq.s32.totalorder %s28, 0
      %p230 = por %p228, %p229
      %p231 = scmp.ne.s32.totalorder %s220, %s223
      %p232 = scmp.eq.s32.totalorder %s33, 1
      %p233 = por %p231, %p232
      %p234 = scmp.ne.s32.totalorder %s223, %s224
      %p235 = scmp.eq.s32.totalorder %s33, 0
      %p236 = por %p234, %p235
      %p237 = scmp.ne.s32.totalorder %s223, %s224
      %p238 = scmp.eq.s32.totalorder %s34, 1
      %p239 = por %p237, %p238
      %p241 = scmp.ne.s32.totalorder %s224, %s240
      %p242 = scmp.eq.s32.totalorder %s34, 0
      %p243 = por %p241, %p242
      %p244 = scmp.le.s32.totalorder 1, %s28
      %p245 = scmp.lt.s32.totalorder %s28, 3
      %p246 = pnand %p244, %p245
      %p247 = pneg %p246
      // Predicated region
      $region9: #{tpu_custom_call.1} parent=5 // pred_check
        _
      $region10: #{tpu_custom_call.1} parent=5 // pred_check_branch
        %249 = sbr.rel (%p246) target = $region12
      $region11: #{tpu_custom_call.1} parent=5 // pred_region
        %s250 = ssub.s32 %s28, 1
      $region12: #{tpu_custom_call.1} parent=5 // pred_fallthru
        _
      %p251 = scmp.lt.s32.totalorder %s28, 2
      // Predicated region
      $region13: #{tpu_custom_call.1} parent=5 // pred_check
        %p252 = pneg %p251
      $region14: #{tpu_custom_call.1} parent=5 // pred_check_branch
        %254 = sbr.rel (%p252) target = $region16
      $region15: #{tpu_custom_call.1} parent=5 // pred_region
        // Predicated region
        $region17: #{tpu_custom_call.1} parent=15 // pred_check
          %p255 = pneg %p62
        $region18: #{tpu_custom_call.1} parent=15 // pred_check_branch
          %257 = sbr.rel (%p255) target = $region20
        $region19: #{tpu_custom_call.1} parent=15 // pred_region
          %s258 = sand.u32 %s52, 1
          %s259 = scalar_lea.sflag [#allocation3], %s258
          %s260 = sand.u32 %s52, 1
          %s261 = smul.addr %s260, 8
          %s262 = scalar_lea.vmem [#allocation2], %s261
          %s264 = ssub.s32 128, 128
          %265 = vsyncadd %s259, %s264
          %s266 = smul.addr %s35, 4
          %s267 = sadd.s32 %s36, %s266
          %s268 = smul.addr %s267, 32
          %s269 = scalar_lea.hbm %s0, %s268
          %s270 = sshll.u32 %s262, 4
          %s271 = int_to_ptr.vmem [resolvable:$true] %s270
          %276 = dma.hbm_to_vmem [thread:$0]  %s269, 128, %s271, %s259, 32, 32, 2
        $region20: #{tpu_custom_call.1} parent=15 // pred_fallthru
          _
        // Predicated region
        $region21: #{tpu_custom_call.1} parent=15 // pred_check
          %p277 = pneg %p90
        $region22: #{tpu_custom_call.1} parent=15 // pred_check_branch
          %279 = sbr.rel (%p277) target = $region24
        $region23: #{tpu_custom_call.1} parent=15 // pred_region
          %s280 = sand.u32 %s80, 1
          %s281 = scalar_lea.sflag [#allocation6], %s280
          %s282 = sand.u32 %s80, 1
          %s283 = smul.addr %s282, 2
          %s284 = scalar_lea.vmem [#allocation5], %s283
          %s286 = ssub.s32 32, 32
          %287 = vsyncadd %s281, %s286
          %s288 = sadd.s32 %s36, %s35
          %s289 = smul.addr %s288, 32
          %s290 = scalar_lea.hbm %s1, %s289
          %s292 = sshll.u32 %s284, 4
          %s293 = int_to_ptr.vmem [resolvable:$true] %s292
          %295 = dma.hbm_to_vmem [thread:$0]  %s290, 32, %s293, %s281
        $region24: #{tpu_custom_call.1} parent=15 // pred_fallthru
          _
        // Predicated region
        $region25: #{tpu_custom_call.1} parent=15 // pred_check
          %p296 = pneg %p118
        $region26: #{tpu_custom_call.1} parent=15 // pred_check_branch
          %298 = sbr.rel (%p296) target = $region28
        $region27: #{tpu_custom_call.1} parent=15 // pred_region
          %p299 = scmp.lt.s32.totalorder %s35, 1
          %s300 = scalar_select %p299, %s35, 1
          %p301 = scmp.lt.s32.totalorder %s36, 0
          %s302 = scalar_select %p301, %s36, 0
          %s303 = sadd.s32 %s302, %s300
          %s304 = smul.addr %s303, 2
          %s305 = scalar_lea.vmem %s2, %s304
        $region28: #{tpu_custom_call.1} parent=15 // pred_fallthru
          _
      $region16: #{tpu_custom_call.1} parent=5 // pred_fallthru
        _
      %p306 = scmp.le.s32.totalorder 1, %s28
      %p307 = scmp.lt.s32.totalorder %s28, 3
      %p308 = pnand %p306, %p307
      %p309 = pneg %p308
      // Predicated region
      $region29: #{tpu_custom_call.1} parent=5 // pred_check
        _
      $region30: #{tpu_custom_call.1} parent=5 // pred_check_branch
        %311 = sbr.rel (%p308) target = $region32
      $region31: #{tpu_custom_call.1} parent=5 // pred_region
        %s312 = ssub.s32 %s28, 1
        %s313 = sand.u32 %s55, 1
        %s314 = scalar_lea.sflag [#allocation3], %s313
        %s315 = sand.u32 %s55, 1
        %s316 = smul.addr %s315, 8
        %s317 = scalar_lea.vmem [#allocation2], %s316
        // Predicated region
        $region33: #{tpu_custom_call.1} parent=31 // pred_check
          %p318 = pneg %p68
        $region34: #{tpu_custom_call.1} parent=31 // pred_check_branch
          %320 = sbr.rel (%p318) target = $region36
        $region35: #{tpu_custom_call.1} parent=31 // pred_region
          %321 = dma.done %s314, 128
        $region36: #{tpu_custom_call.1} parent=31 // pred_fallthru
          _
        %s322 = sand.u32 %s83, 1
        %s323 = scalar_lea.sflag [#allocation6], %s322
        %s324 = sand.u32 %s83, 1
        %s325 = smul.addr %s324, 2
        %s326 = scalar_lea.vmem [#allocation5], %s325
        // Predicated region
        $region37: #{tpu_custom_call.1} parent=31 // pred_check
          %p327 = pneg %p96
        $region38: #{tpu_custom_call.1} parent=31 // pred_check_branch
          %329 = sbr.rel (%p327) target = $region40
        $region39: #{tpu_custom_call.1} parent=31 // pred_region
          %330 = dma.done %s323, 32
        $region40: #{tpu_custom_call.1} parent=31 // pred_fallthru
          _
        %s331 = sand.u32 %s55, 1
        %s332 = scalar_lea.sflag [#allocation3], %s331
        %s333 = sand.u32 %s55, 1
        %s334 = smul.addr %s333, 8
        %s335 = scalar_lea.vmem [#allocation2], %s334
        %p336 = pneg %p68
        %p337 = pneg %p65
        %s338 = sand.u32 %s83, 1
        %s339 = scalar_lea.sflag [#allocation6], %s338
        %s340 = sand.u32 %s83, 1
        %s341 = smul.addr %s340, 2
        %s342 = scalar_lea.vmem [#allocation5], %s341
        %p343 = pneg %p96
        %p344 = pneg %p93
        %p345 = scmp.lt.s32.totalorder %s37, 1
        %s346 = scalar_select %p345, %s37, 1
        %p347 = scmp.lt.s32.totalorder %s38, 0
        %s348 = scalar_select %p347, %s38, 0
        %s349 = sadd.s32 %s348, %s346
        %s350 = smul.addr %s349, 2
        %s351 = scalar_lea.vmem %s2, %s350
        %p352 = pneg %p124
        %p353 = pneg %p121
        %p354 = pneg %p152
        %p355 = pneg %p149
        %s356 = sand.u32 %s139, 1
        %s357 = scalar_lea.sflag [#allocation4], %s356
        %s358 = sand.u32 %s139, 1
        %s359 = smul.addr %s358, 4
        %s360 = scalar_lea.vmem [#allocation7], %s359
        %p361 = pneg %p180
        %p362 = pneg %p177
        %s363 = sand.u32 %s33, 1
        %s364 = scalar_lea.sflag [#allocation9], %s363
        %s365 = sand.u32 %s167, 1
        %s366 = smul.addr %s365, 4
        %s367 = scalar_lea.vmem [#allocation8], %s366
        %p368 = pneg %p208
        %p369 = pneg %p205
        %s370 = sand.u32 %s33, 1
        %s371 = scalar_lea.sflag [#allocation9], %s370
        %s372 = sand.u32 %s195, 1
        %s373 = smul.addr %s372, 4
        %s374 = scalar_lea.vmem [#allocation10], %s373
        %p375 = pneg %p236
        %p376 = pneg %p233
        %s377 = sand.u32 %s223, 1
        %s378 = scalar_lea.sflag [#allocation12], %s377
        %s379 = sand.u32 %s223, 1
        %s380 = scalar_lea.vmem [#allocation11], %s379
        %p381 = scmp.lt.s32.totalorder %s37, 1
        %s382 = scalar_select %p381, %s37, 1
        %p383 = scmp.lt.s32.totalorder %s38, 0
        %s384 = scalar_select %p383, %s38, 0
        %s385 = sadd.s32 %s384, %s382
        %s386 = smul.addr %s385, 2
        %s387 = scalar_lea.vmem %s2, %s386
        %v388 = vld [vmem:[%s326] sm:$0x3]
        %v389 = vld [vmem:[%s387] sm:$0x3]
        %v390 = vld [vmem:[%s317] sm:$0x3]
        %s391 = scalar_lea.vmem %s317, 2 [#allocation2]
        %v392 = vld [vmem:[%s391] sm:$0x3]
        %v393 = vmax.f32 %v390, %v392
        %s394 = scalar_lea.vmem %s317, 4 [#allocation2]
        %v395 = vld [vmem:[%s394] sm:$0x3]
        %v396 = vmax.f32 %v393, %v395
        %s397 = scalar_lea.vmem %s317, 6 [#allocation2]
        %v398 = vld [vmem:[%s397] sm:$0x3]
        %v399 = vmax.f32 %v396, %v398
        %v400 = vsub.f32 %v390, %v399
        %v401 = vmul.f32 %v400, 1.442695
        %v402 = vpow.pop %v401
        %v403 = vsub.f32 %v392, %v399
        %v404 = vmul.f32 %v403, 1.442695
        %v405 = vpow.pop %v404
        %v406 = vadd.f32 %v402, %v405
        %v407 = vsub.f32 %v395, %v399
        %v408 = vmul.f32 %v407, 1.442695
        %v409 = vpow.pop %v408
        %v410 = vadd.f32 %v406, %v409
        %v411 = vsub.f32 %v398, %v399
        %v412 = vmul.f32 %v411, 1.442695
        %v413 = vpow.pop %v412
        %v414 = vadd.f32 %v410, %v413
        %v415 = vrcp.pop %v414
        %v416 = vmul.f32 %v414, %v415
        %v417 = vsub.f32 2.0, %v416
        %v418 = vmul.f32 %v415, %v417
        %v419 = vmul.f32 %v402, %v418
        %vm420 = vcmp.eq.s32.totalorder %v388, 0
        %v421 = vsel %vm420, 1, 0
        %v422 = vcvt.s32.f32 %v421
        %v423 = vmul.f32 %v422, %v419
        %vm424 = vcmask 1041408
        %v425 = vsel %vm424, %v423, 0.0
        %v426 = vrot.slane %v425, 4
        %v427 = vadd.f32 %v425, %v426
        %v428 = vrot.slane %v427, 2
        %v429 = vadd.f32 %v427, %v428
        %v430 = vrot.slane %v429, 1
        %v431 = vadd.f32 %v429, %v430
        %432 = vst [vmem:[%s360] sm:$0x1] %v431
        %v433 = vsel %vm424, %v419, 0.0
        %v434 = vrot.slane %v433, 4
        %v435 = vadd.f32 %v433, %v434
        %v436 = vrot.slane %v435, 2
        %v437 = vadd.f32 %v435, %v436
        %v438 = vrot.slane %v437, 1
        %v439 = vadd.f32 %v437, %v438
        %440 = vst [vmem:[%s367] sm:$0x1] %v439
        %v441 = vsel %vm424, %v422, 0.0
        %v442 = vrot.slane %v441, 4
        %v443 = vadd.f32 %v441, %v442
        %v444 = vrot.slane %v443, 2
        %v445 = vadd.f32 %v443, %v444
        %v446 = vrot.slane %v445, 1
        %v447 = vadd.f32 %v445, %v446
        %448 = vst [vmem:[%s374] sm:$0x1] %v447
        %v449 = vmul.f32 %v422, %v390
        %v450 = vadd.f32 %v449, 0.0
        %v451 = vld [vmem:[%s391] sm:$0x3]
        %v452 = vsub.f32 %v451, %v399
        %v453 = vmul.f32 %v452, 1.442695
        %v454 = vpow.pop %v453
        %v455 = vmul.f32 %v454, %v418
        %vm456 = vcmp.eq.s32.totalorder %v388, 1
        %v457 = vsel %vm456, 1, 0
        %v458 = vcvt.s32.f32 %v457
        %v459 = vmul.f32 %v458, %v455
        %v460 = vsel %vm424, %v459, 0.0
        %v461 = vrot.slane %v460, 4
        %v462 = vadd.f32 %v460, %v461
        %v463 = vrot.slane %v462, 2
        %v464 = vadd.f32 %v462, %v463
        %v465 = vrot.slane %v464, 1
        %v466 = vadd.f32 %v464, %v465
        %467 = vst [vmem:[%s360 + $0x1] sm:$0x1] %v466
        %v468 = vsel %vm424, %v455, 0.0
        %v469 = vrot.slane %v468, 4
        %v470 = vadd.f32 %v468, %v469
        %v471 = vrot.slane %v470, 2
        %v472 = vadd.f32 %v470, %v471
        %v473 = vrot.slane %v472, 1
        %v474 = vadd.f32 %v472, %v473
        %475 = vst [vmem:[%s367 + $0x1] sm:$0x1] %v474
        %v476 = vsel %vm424, %v458, 0.0
        %v477 = vrot.slane %v476, 4
        %v478 = vadd.f32 %v476, %v477
        %v479 = vrot.slane %v478, 2
        %v480 = vadd.f32 %v478, %v479
        %v481 = vrot.slane %v480, 1
        %v482 = vadd.f32 %v480, %v481
        %483 = vst [vmem:[%s374 + $0x1] sm:$0x1] %v482
        %v484 = vmul.f32 %v458, %v451
        %v485 = vadd.f32 %v450, %v484
        %v486 = vld [vmem:[%s394] sm:$0x3]
        %v487 = vsub.f32 %v486, %v399
        %v488 = vmul.f32 %v487, 1.442695
        %v489 = vpow.pop %v488
        %v490 = vmul.f32 %v489, %v418
        %vm491 = vcmp.eq.s32.totalorder %v388, 2
        %v492 = vsel %vm491, 1, 0
        %v493 = vcvt.s32.f32 %v492
        %v494 = vmul.f32 %v493, %v490
        %v495 = vsel %vm424, %v494, 0.0
        %v496 = vrot.slane %v495, 4
        %v497 = vadd.f32 %v495, %v496
        %v498 = vrot.slane %v497, 2
        %v499 = vadd.f32 %v497, %v498
        %v500 = vrot.slane %v499, 1
        %v501 = vadd.f32 %v499, %v500
        %502 = vst [vmem:[%s360 + $0x2] sm:$0x1] %v501
        %v503 = vsel %vm424, %v490, 0.0
        %v504 = vrot.slane %v503, 4
        %v505 = vadd.f32 %v503, %v504
        %v506 = vrot.slane %v505, 2
        %v507 = vadd.f32 %v505, %v506
        %v508 = vrot.slane %v507, 1
        %v509 = vadd.f32 %v507, %v508
        %510 = vst [vmem:[%s367 + $0x2] sm:$0x1] %v509
        %v511 = vsel %vm424, %v493, 0.0
        %v512 = vrot.slane %v511, 4
        %v513 = vadd.f32 %v511, %v512
        %v514 = vrot.slane %v513, 2
        %v515 = vadd.f32 %v513, %v514
        %v516 = vrot.slane %v515, 1
        %v517 = vadd.f32 %v515, %v516
        %518 = vst [vmem:[%s374 + $0x2] sm:$0x1] %v517
        %v519 = vmul.f32 %v493, %v486
        %v520 = vadd.f32 %v485, %v519
        %v521 = vld [vmem:[%s397] sm:$0x3]
        %v522 = vsub.f32 %v521, %v399
        %v523 = vmul.f32 %v522, 1.442695
        %v524 = vpow.pop %v523
        %v525 = vmul.f32 %v524, %v418
        %vm526 = vcmp.eq.s32.totalorder %v388, 3
        %v527 = vsel %vm526, 1, 0
        %v528 = vcvt.s32.f32 %v527
        %v529 = vmul.f32 %v528, %v525
        %v530 = vsel %vm424, %v529, 0.0
        %v531 = vrot.slane %v530, 4
        %v532 = vadd.f32 %v530, %v531
        %v533 = vrot.slane %v532, 2
        %v534 = vadd.f32 %v532, %v533
        %v535 = vrot.slane %v534, 1
        %v536 = vadd.f32 %v534, %v535
        %537 = vst [vmem:[%s360 + $0x3] sm:$0x1] %v536
        %v538 = vsel %vm424, %v525, 0.0
        %v539 = vrot.slane %v538, 4
        %v540 = vadd.f32 %v538, %v539
        %v541 = vrot.slane %v540, 2
        %v542 = vadd.f32 %v540, %v541
        %v543 = vrot.slane %v542, 1
        %v544 = vadd.f32 %v542, %v543
        %545 = vst [vmem:[%s367 + $0x3] sm:$0x1] %v544
        %v546 = vsel %vm424, %v528, 0.0
        %v547 = vrot.slane %v546, 4
        %v548 = vadd.f32 %v546, %v547
        %v549 = vrot.slane %v548, 2
        %v550 = vadd.f32 %v548, %v549
        %v551 = vrot.slane %v550, 1
        %v552 = vadd.f32 %v550, %v551
        %553 = vst [vmem:[%s374 + $0x3] sm:$0x1] %v552
        %v554 = vmul.f32 %v528, %v521
        %v555 = vadd.f32 %v520, %v554
        %v556 = vlog2.pop %v414
        %v557 = vmul.f32 %v556, 0.6931472
        %v558 = vadd.f32 %v557, %v399
        %v559 = vsub.f32 %v558, %v555
        %v560 = vmul.f32 %v559, %v389
        %v561 = vsel %vm424, %v560, 0.0
        %v562 = vrot.slane %v561, 4
        %v563 = vadd.f32 %v561, %v562
        %v564 = vrot.slane %v563, 2
        %v565 = vadd.f32 %v563, %v564
        %v566 = vrot.slane %v565, 1
        %v567 = vadd.f32 %v565, %v566
        %568 = vst [vmem:[%s380] sm:$0x1] %v567
        %s569 = sand.u32 %s139, 1
        %s570 = scalar_lea.sflag [#allocation4], %s569
        %s571 = sand.u32 %s139, 1
        %s572 = smul.addr %s571, 4
        %s573 = scalar_lea.vmem [#allocation7], %s572
        %s574 = sand.u32 %s33, 1
        %s575 = scalar_lea.sflag [#allocation9], %s574
        %s576 = sand.u32 %s167, 1
        %s577 = smul.addr %s576, 4
        %s578 = scalar_lea.vmem [#allocation8], %s577
        %s579 = sand.u32 %s33, 1
        %s580 = scalar_lea.sflag [#allocation9], %s579
        %s581 = sand.u32 %s195, 1
        %s582 = smul.addr %s581, 4
        %s583 = scalar_lea.vmem [#allocation10], %s582
        %s584 = sand.u32 %s223, 1
        %s585 = scalar_lea.sflag [#allocation12], %s584
        %s586 = sand.u32 %s223, 1
        %s587 = scalar_lea.vmem [#allocation11], %s586
        // Predicated region
        $region41: #{tpu_custom_call.1} parent=31 // pred_check
          %p588 = pneg %p149
        $region42: #{tpu_custom_call.1} parent=31 // pred_check_branch
          %590 = sbr.rel (%p588) target = $region44
        $region43: #{tpu_custom_call.1} parent=31 // pred_region
          %s592 = ssub.s32 64, 64
          %593 = vsyncadd %s570, %s592
          %s594 = sadd.s32 %s38, %s37
          %s595 = smul.addr %s594, 64
          %s596 = scalar_lea.hbm %s3, %s595
          %s598 = sshll.u32 %s573, 4
          %s599 = int_to_ptr.vmem [resolvable:$true] %s598
          %601 = dma.vmem_to_hbm [thread:$0]  %s599, 64, %s596, %s570
        $region44: #{tpu_custom_call.1} parent=31 // pred_fallthru
          _
        // Predicated region
        $region45: #{tpu_custom_call.1} parent=31 // pred_check
          %p602 = pneg %p177
        $region46: #{tpu_custom_call.1} parent=31 // pred_check_branch
          %604 = sbr.rel (%p602) target = $region48
        $region47: #{tpu_custom_call.1} parent=31 // pred_region
          %s606 = ssub.s32 64, 64
          %607 = vsyncadd %s575, %s606
          %s608 = sadd.s32 %s38, %s37
          %s609 = smul.addr %s608, 64
          %s610 = scalar_lea.hbm %s4, %s609
          %s612 = sshll.u32 %s578, 4
          %s613 = int_to_ptr.vmem [resolvable:$true] %s612
          %615 = dma.vmem_to_hbm [thread:$0]  %s613, 64, %s610, %s575
        $region48: #{tpu_custom_call.1} parent=31 // pred_fallthru
          _
        // Predicated region
        $region49: #{tpu_custom_call.1} parent=31 // pred_check
          %p616 = pneg %p205
        $region50: #{tpu_custom_call.1} parent=31 // pred_check_branch
          %618 = sbr.rel (%p616) target = $region52
        $region51: #{tpu_custom_call.1} parent=31 // pred_region
          %s620 = ssub.s32 64, 64
          %621 = vsyncadd %s580, %s620
          %s622 = sadd.s32 %s38, %s37
          %s623 = smul.addr %s622, 64
          %s624 = scalar_lea.hbm %s5, %s623
          %s626 = sshll.u32 %s583, 4
          %s627 = int_to_ptr.vmem [resolvable:$true] %s626
          %629 = dma.vmem_to_hbm [thread:$0]  %s627, 64, %s624, %s580
        $region52: #{tpu_custom_call.1} parent=31 // pred_fallthru
          _
        // Predicated region
        $region53: #{tpu_custom_call.1} parent=31 // pred_check
          %p630 = pneg %p233
        $region54: #{tpu_custom_call.1} parent=31 // pred_check_branch
          %632 = sbr.rel (%p630) target = $region56
        $region55: #{tpu_custom_call.1} parent=31 // pred_region
          %s634 = ssub.s32 16, 16
          %635 = vsyncadd %s585, %s634
          %s636 = sadd.s32 %s38, %s37
          %s637 = smul.addr %s636, 16
          %s638 = scalar_lea.hbm %s6, %s637
          %s640 = sshll.u32 %s587, 4
          %s641 = int_to_ptr.vmem [resolvable:$true] %s640
          %643 = dma.vmem_to_hbm [thread:$0]  %s641, 16, %s638, %s585
        $region56: #{tpu_custom_call.1} parent=31 // pred_fallthru
          _
      $region32: #{tpu_custom_call.1} parent=5 // pred_fallthru
        _
      %p644 = scmp.le.s32.totalorder 2, %s28
      // Predicated region
      $region57: #{tpu_custom_call.1} parent=5 // pred_check
        %p645 = pneg %p644
      $region58: #{tpu_custom_call.1} parent=5 // pred_check_branch
        %647 = sbr.rel (%p645) target = $region60
      $region59: #{tpu_custom_call.1} parent=5 // pred_region
        %s648 = ssub.s32 %s28, 2
        // Predicated region
        $region61: #{tpu_custom_call.1} parent=59 // pred_check
          %p649 = pneg %p155
        $region62: #{tpu_custom_call.1} parent=59 // pred_check_branch
          %651 = sbr.rel (%p649) target = $region64
        $region63: #{tpu_custom_call.1} parent=59 // pred_region
          %s652 = sand.u32 %s140, 1
          %s653 = scalar_lea.sflag [#allocation4], %s652
          %s654 = sand.u32 %s140, 1
          %s655 = smul.addr %s654, 4
          %s656 = scalar_lea.vmem [#allocation7], %s655
          %657 = dma.done %s653, 64
        $region64: #{tpu_custom_call.1} parent=59 // pred_fallthru
          _
        // Predicated region
        $region65: #{tpu_custom_call.1} parent=59 // pred_check
          %p658 = pneg %p183
        $region66: #{tpu_custom_call.1} parent=59 // pred_check_branch
          %660 = sbr.rel (%p658) target = $region68
        $region67: #{tpu_custom_call.1} parent=59 // pred_region
          %s661 = sand.u32 %s34, 1
          %s662 = scalar_lea.sflag [#allocation9], %s661
          %s663 = sand.u32 %s168, 1
          %s664 = smul.addr %s663, 4
          %s665 = scalar_lea.vmem [#allocation8], %s664
          %666 = dma.done %s662, 64
        $region68: #{tpu_custom_call.1} parent=59 // pred_fallthru
          _
        // Predicated region
        $region69: #{tpu_custom_call.1} parent=59 // pred_check
          %p667 = pneg %p211
        $region70: #{tpu_custom_call.1} parent=59 // pred_check_branch
          %669 = sbr.rel (%p667) target = $region72
        $region71: #{tpu_custom_call.1} parent=59 // pred_region
          %s670 = sand.u32 %s34, 1
          %s671 = scalar_lea.sflag [#allocation9], %s670
          %s672 = sand.u32 %s196, 1
          %s673 = smul.addr %s672, 4
          %s674 = scalar_lea.vmem [#allocation10], %s673
          %675 = dma.done %s671, 64
        $region72: #{tpu_custom_call.1} parent=59 // pred_fallthru
          _
        // Predicated region
        $region73: #{tpu_custom_call.1} parent=59 // pred_check
          %p676 = pneg %p239
        $region74: #{tpu_custom_call.1} parent=59 // pred_check_branch
          %678 = sbr.rel (%p676) target = $region76
        $region75: #{tpu_custom_call.1} parent=59 // pred_region
          %s679 = sand.u32 %s224, 1
          %s680 = scalar_lea.sflag [#allocation12], %s679
          %s681 = sand.u32 %s224, 1
          %s682 = scalar_lea.vmem [#allocation11], %s681
          %683 = dma.done %s680, 16
        $region76: #{tpu_custom_call.1} parent=59 // pred_fallthru
          _
      $region60: #{tpu_custom_call.1} parent=5 // pred_fallthru
        _
    $region6: #{tpu_custom_call.1} parent=1 // loop_footer
      %s32 = sadd.s32 1, %s28
    $region7: #{tpu_custom_call.1} parent=1 // loop_footer_branch
      %27 = sbr.rel target = $region3
    $region8: #{tpu_custom_call.1} parent=1 // loop_exit
      _
    %684 = vsyncpa [#allocation3], 1
    %s685 = scalar_lea.sflag [#allocation3], 1
    %686 = vsyncpa %s685, 1
    %687 = vsyncpa [#allocation6], 1
    %s688 = scalar_lea.sflag [#allocation6], 1
    %689 = vsyncpa %s688, 1
    %690 = vsyncpa [#allocation4], 1
    %s691 = scalar_lea.sflag [#allocation4], 1
    %692 = vsyncpa %s691, 1
    %693 = vsyncpa [#allocation9], 1
    %s694 = scalar_lea.sflag [#allocation9], 1
    %695 = vsyncpa %s694, 1
    %696 = vsyncpa [#allocation12], 1
    %s697 = scalar_lea.sflag [#allocation12], 1
    %698 = vsyncpa %s697, 1

</llo_original>
